<compile_context>
chip_gen: v5e
topology: v5e:2x2
jax: 0.10.0
libtpu: 0.0.40
codegen_flags: <defaults>
</compile_context>

<pallas_src>
import functools

import jax
import jax.numpy as jnp
from jax.experimental import pallas as pl
from jax.experimental.pallas import tpu as pltpu


def _convlstm_kernel(x_ref, h_ref, c_ref, wx_ref, wh_ref,
                     h_next_ref, c_next_ref, *, matmul_dtype):
    """Fused 1x1-conv (two small matmuls) + LSTM gate update for one tile.

    x_ref:      (1, Cin,  ts)      input tile, lane axis = spatial
    h_ref:      (1, Chid, ts)      previous hidden state tile
    c_ref:      (1, Chid, ts)      previous cell state tile (float32)
    wx_ref:     (4*Chid, Cin)      conv1x1 weight, input-channel part
    wh_ref:     (4*Chid, Chid)     conv1x1 weight, hidden-channel part
    h_next_ref: (1, Chid, ts)
    c_next_ref: (1, Chid, ts)      float32
    """
    hid = c_ref.shape[-2]

    x = x_ref[0]                                          # (Cin, ts)
    h = h_ref[0]                                          # (Chid, ts)
    if matmul_dtype is not None:
        # In-vreg cast: MXU gets low-precision operands without an extra
        # wrapper-side HBM cast pass.
        x = x.astype(matmul_dtype)
        h = h.astype(matmul_dtype)

    gates = (jnp.dot(wx_ref[...], x, preferred_element_type=jnp.float32)
             + jnp.dot(wh_ref[...], h, preferred_element_type=jnp.float32))
    # gates: (4*Chid, ts), f32.  torch.split order along out-channels:
    # input_gate, forget_gate, out_gate, in_node.
    # sigmoid(x) == 0.5*tanh(0.5*x) + 0.5  (exact; one EUP op, no exp+div).
    ifo = 0.5 * jnp.tanh(0.5 * gates[:3 * hid, :]) + 0.5
    g = jnp.tanh(gates[3 * hid:, :])

    i = ifo[:hid, :]
    f = ifo[hid:2 * hid, :]
    o = ifo[2 * hid:, :]

    c_prev = c_ref[0].astype(jnp.float32)
    c_next = f * c_prev + i * g
    h_next = o * jnp.tanh(c_next)

    c_next_ref[0] = c_next.astype(c_next_ref.dtype)
    h_next_ref[0] = h_next.astype(h_next_ref.dtype)


def convlstm_forward(x, state, weight, *, hidden_channels,
                     spatial_tile=2048, matmul_dtype=None):
    """ConvLSTM forward (matches the PyTorch module, kernel_size=1, bias=False).

    x:      [B, Cin, H, W]   (NCHW)
    state:  None or (hidden_state, cell_state), each [B, Chid, H, W]
    weight: [4*Chid, Cin+Chid, 1, 1]  (PyTorch Conv2d weight layout)
    matmul_dtype: optional dtype (e.g. jnp.bfloat16) for the MXU operands.
                  Safe on v5e/v6e/v7x: only the matmul uses it; all gate math
                  and the cell state stay float32.

    Note: gate slicing is sublane-aligned (free) when hidden_channels % 8 == 0;
    other values are still correct but incur sublane-shuffle copies.

    Returns (hidden_next, (hidden_next, cell_next)) in NCHW.
    cell_next is carried in float32 (recommended when inputs are low precision).
    """
    b, cin, hgt, wid = x.shape
    chid = hidden_channels
    hw = hgt * wid

    if state is None:
        hidden_state = jnp.zeros((b, chid, hgt, wid), dtype=x.dtype)
        cell_state = jnp.zeros((b, chid, hgt, wid), dtype=jnp.float32)
    else:
        hidden_state, cell_state = state

    # channels-as-contraction / spatial-as-lane layout: no transposes, no concat.
    x3 = x.reshape(b, cin, hw)
    h3 = hidden_state.astype(x.dtype).reshape(b, chid, hw)
    c3 = cell_state.astype(jnp.float32).reshape(b, chid, hw)

    # Conv2d weight (4*Chid, Cin+Chid, 1, 1) -> split into the x- and h-parts.
    w2d = weight.reshape(4 * chid, cin + chid)
    wx = w2d[:, :cin]
    wh = w2d[:, cin:]
    if matmul_dtype is not None:
        wx = wx.astype(matmul_dtype)   # tiny; cast once in the wrapper
        wh = wh.astype(matmul_dtype)

    # Spatial tile: lane-dense multiple of 128.  No padding; the partial last
    # block (if any) is masked by Pallas.  Shrink the tile only if the grid
    # would otherwise have too few steps for pipelining / megacore sharding.
    hw_lanes = pl.cdiv(hw, 128) * 128
    ts = max(128, min(int(spatial_tile), hw_lanes))
    ts = pl.cdiv(ts, 128) * 128
    while ts > 512 and b * pl.cdiv(hw, ts) < 4:
        ts = max(512, pl.cdiv(ts // 2, 128) * 128)
    n_sp = pl.cdiv(hw, ts)

    # VMEM budget: double-buffered input/output blocks + resident weights +
    # elementwise intermediates (gates, ifo, g/c_next/h_next f32 temps).
    # Capped at 52 MiB -> safe on v7x's 64 MiB physical VMEM, ample on v5e/v6e.
    in_b = jnp.dtype(x.dtype).itemsize
    w_b = jnp.dtype(wx.dtype).itemsize
    block_bytes = (cin * ts * in_b          # x tile
                   + chid * ts * in_b       # h tile
                   + chid * ts * 4          # c tile (f32)
                   + chid * ts * in_b       # h_next tile
                   + chid * ts * 4)         # c_next tile (f32)
    weight_bytes = 4 * chid * (cin + chid) * w_b
    temp_bytes = (4 + 3 + 3) * chid * ts * 4   # gates + ifo + g/c_next/h_next
    vmem_est = 2 * block_bytes + 2 * weight_bytes + temp_bytes
    vmem_limit = int(min(max(2 * vmem_est, 16 << 20), 52 << 20))

    kernel = functools.partial(_convlstm_kernel, matmul_dtype=matmul_dtype)

    h_rows, c_rows = pl.pallas_call(
        kernel,
        out_shape=(jax.ShapeDtypeStruct((b, chid, hw), x.dtype),
                   jax.ShapeDtypeStruct((b, chid, hw), jnp.float32)),
        grid_spec=pltpu.PrefetchScalarGridSpec(
            num_scalar_prefetch=0,
            grid=(b, n_sp),
            in_specs=[
                pl.BlockSpec((1, cin, ts), lambda bi, si: (bi, 0, si)),
                pl.BlockSpec((1, chid, ts), lambda bi, si: (bi, 0, si)),
                pl.BlockSpec((1, chid, ts), lambda bi, si: (bi, 0, si)),
                # constant index_map -> fetched once (block revisit), stays resident
                pl.BlockSpec((4 * chid, cin), lambda bi, si: (0, 0)),
                pl.BlockSpec((4 * chid, chid), lambda bi, si: (0, 0)),
            ],
            out_specs=[
                pl.BlockSpec((1, chid, ts), lambda bi, si: (bi, 0, si)),
                pl.BlockSpec((1, chid, ts), lambda bi, si: (bi, 0, si)),
            ],
        ),
        compiler_params=pltpu.CompilerParams(
            dimension_semantics=("parallel", "parallel"),
            vmem_limit_bytes=vmem_limit),
    )(x3, h3, c3, wx, wh)

    h_next = h_rows.reshape(b, chid, hgt, wid)
    c_next = c_rows.reshape(b, chid, hgt, wid)
    return h_next, (h_next, c_next)


def _reference_forward(x, state, weight, hidden_channels):
    """Pure-JAX reference mirroring the PyTorch module (for sanity check)."""
    b, cin, hgt, wid = x.shape
    chid = hidden_channels
    if state is None:
        h = jnp.zeros((b, chid, hgt, wid), x.dtype)
        c = jnp.zeros((b, chid, hgt, wid), x.dtype)
    else:
        h, c = state
    combined = jnp.concatenate([x, h], axis=1)                      # NCHW
    w2d = weight.reshape(4 * chid, cin + chid)                      # 1x1 conv
    gates = jnp.einsum('oc,bchw->bohw', w2d, combined)
    ig, fg, og, gn = jnp.split(gates, 4, axis=1)
    i = jax.nn.sigmoid(ig)
    f = jax.nn.sigmoid(fg)
    o = jax.nn.sigmoid(og)
    g = jnp.tanh(gn)
    c_next = f * c + i * g
    h_next = o * jnp.tanh(c_next)
    return h_next, (h_next, c_next)


if __name__ == "__main__":
    B, CIN, HID, H, W = 2, 4, 32, 16, 16

    key = jax.random.PRNGKey(0)
    kx, kh, kc, kw = jax.random.split(key, 4)

    x = jax.random.normal(kx, (B, CIN, H, W), dtype=jnp.float32)
    h0 = jax.random.normal(kh, (B, HID, H, W), dtype=jnp.float32)
    c0 = jax.random.normal(kc, (B, HID, H, W), dtype=jnp.float32)
    # Conv2d(in=CIN+HID, out=4*HID, kernel_size=1, bias=False) weight
    weight = (jax.random.normal(kw, (4 * HID, CIN + HID, 1, 1), dtype=jnp.float32)
              * 0.1)

    fwd = jax.jit(functools.partial(convlstm_forward, hidden_channels=HID))
    fwd_bf16 = jax.jit(functools.partial(convlstm_forward, hidden_channels=HID,
                                         matmul_dtype=jnp.bfloat16))

    # case 1: with an explicit state (full-precision path)
    h_next, (h_next2, c_next) = fwd(x, (h0, c0), weight)
    jax.block_until_ready((h_next, c_next))

    # case 2: state=None (zero-initialized hidden/cell)
    h_next0, (_, c_next0) = fwd(x, None, weight)
    jax.block_until_ready((h_next0, c_next0))

    # case 3: bf16 MXU operands (valid on v5e/v6e/v7x), f32 gate math + cell
    h_bf, (_, c_bf) = fwd_bf16(x, (h0, c0), weight)
    jax.block_until_ready((h_bf, c_bf))

    # sanity check against a pure-JAX reference
    rh, (_, rc) = _reference_forward(x, (h0, c0), weight, HID)
    rh0, (_, rc0) = _reference_forward(x, None, weight, HID)
    assert jnp.allclose(h_next, rh, atol=1e-5, rtol=1e-5)
    assert jnp.allclose(c_next, rc, atol=1e-5, rtol=1e-5)
    assert jnp.allclose(h_next0, rh0, atol=1e-5, rtol=1e-5)
    assert jnp.allclose(c_next0, rc0, atol=1e-5, rtol=1e-5)
    # bf16 matmul operands -> loose tolerance
    assert jnp.allclose(h_bf, rh, atol=1e-1, rtol=1e-1)
    assert jnp.allclose(c_bf, rc, atol=1e-1, rtol=1e-1)

    print("KERNEL_OK")
</pallas_src>

<mosaic_0001>
module attributes {stable_mosaic.version = 11 : i64} {
  func.func @_convlstm_kernel(%arg0: i32, %arg1: i32, %arg2: memref<1x4x256xf32, #tpu.memory_space<vmem>>, %arg3: memref<1x32x256xf32, #tpu.memory_space<vmem>>, %arg4: memref<1x32x256xf32, #tpu.memory_space<vmem>>, %arg5: memref<128x4xf32, #tpu.memory_space<vmem>>, %arg6: memref<128x32xf32, #tpu.memory_space<vmem>>, %arg7: memref<1x32x256xf32, #tpu.memory_space<vmem>>, %arg8: memref<1x32x256xf32, #tpu.memory_space<vmem>>) attributes {dimension_semantics = [#tpu.dimension_semantics<parallel>, #tpu.dimension_semantics<parallel>], iteration_bounds = array<i64: 2, 1>, scalar_prefetch = 0 : i64, scratch_operands = 0 : i64, tpu.core_type = #tpu.core_type<tc>, window_params = [{transform_indices = @transform_0, window_bounds = array<i64: 1, 4, 256>}, {transform_indices = @transform_1, window_bounds = array<i64: 1, 32, 256>}, {transform_indices = @transform_2, window_bounds = array<i64: 1, 32, 256>}, {pipeline_mode = #tpu.pipeline_mode<synchronous>, transform_indices = @transform_3, window_bounds = array<i64: 128, 4>}, {pipeline_mode = #tpu.pipeline_mode<synchronous>, transform_indices = @transform_4, window_bounds = array<i64: 128, 32>}, {transform_indices = @transform_5, window_bounds = array<i64: 1, 32, 256>}, {transform_indices = @transform_6, window_bounds = array<i64: 1, 32, 256>}]} {
    %c0 = arith.constant 0 : index
    %c0_0 = arith.constant 0 : index
    %c0_1 = arith.constant 0 : index
    %0 = vector.load %arg2[%c0, %c0_0, %c0_1] : memref<1x4x256xf32, #tpu.memory_space<vmem>>, vector<1x4x256xf32>
    %1 = vector.shape_cast %0 : vector<1x4x256xf32> to vector<4x256xf32>
    %c0_2 = arith.constant 0 : index
    %c0_3 = arith.constant 0 : index
    %c0_4 = arith.constant 0 : index
    %2 = vector.load %arg3[%c0_2, %c0_3, %c0_4] : memref<1x32x256xf32, #tpu.memory_space<vmem>>, vector<1x32x256xf32>
    %3 = vector.shape_cast %2 : vector<1x32x256xf32> to vector<32x256xf32>
    %c0_5 = arith.constant 0 : index
    %c0_6 = arith.constant 0 : index
    %4 = vector.load %arg5[%c0_5, %c0_6] : memref<128x4xf32, #tpu.memory_space<vmem>>, vector<128x4xf32>
    %cst = arith.constant dense<0.000000e+00> : vector<128x256xf32>
    %5 = tpu.matmul %4, %1, %cst {dimension_numbers = #tpu.dot_dimension_numbers<[1], [0], [0], [1], [0, 0, 1, 1], [], []>} : vector<128x4xf32>, vector<4x256xf32>, vector<128x256xf32> -> vector<128x256xf32>
    %c0_7 = arith.constant 0 : index
    %c0_8 = arith.constant 0 : index
    %6 = vector.load %arg6[%c0_7, %c0_8] : memref<128x32xf32, #tpu.memory_space<vmem>>, vector<128x32xf32>
    %cst_9 = arith.constant dense<0.000000e+00> : vector<128x256xf32>
    %7 = tpu.matmul %6, %3, %cst_9 {dimension_numbers = #tpu.dot_dimension_numbers<[1], [0], [0], [1], [0, 0, 1, 1], [], []>} : vector<128x32xf32>, vector<32x256xf32>, vector<128x256xf32> -> vector<128x256xf32>
    %8 = arith.addf %5, %7 : vector<128x256xf32>
    %9 = vector.extract_strided_slice %8 {offsets = [0, 0], sizes = [96, 256], strides = [1, 1]} : vector<128x256xf32> to vector<96x256xf32>
    %cst_10 = arith.constant 5.000000e-01 : f32
    %10 = vector.broadcast %cst_10 : f32 to vector<96x256xf32>
    %11 = arith.mulf %10, %9 : vector<96x256xf32>
    %12 = math.tanh %11 : vector<96x256xf32>
    %cst_11 = arith.constant 5.000000e-01 : f32
    %13 = vector.broadcast %cst_11 : f32 to vector<96x256xf32>
    %14 = arith.mulf %13, %12 : vector<96x256xf32>
    %cst_12 = arith.constant 5.000000e-01 : f32
    %15 = vector.broadcast %cst_12 : f32 to vector<96x256xf32>
    %16 = arith.addf %14, %15 : vector<96x256xf32>
    %17 = vector.extract_strided_slice %8 {offsets = [96, 0], sizes = [32, 256], strides = [1, 1]} : vector<128x256xf32> to vector<32x256xf32>
    %18 = math.tanh %17 : vector<32x256xf32>
    %19 = vector.extract_strided_slice %16 {offsets = [0, 0], sizes = [32, 256], strides = [1, 1]} : vector<96x256xf32> to vector<32x256xf32>
    %20 = vector.extract_strided_slice %16 {offsets = [32, 0], sizes = [32, 256], strides = [1, 1]} : vector<96x256xf32> to vector<32x256xf32>
    %21 = vector.extract_strided_slice %16 {offsets = [64, 0], sizes = [32, 256], strides = [1, 1]} : vector<96x256xf32> to vector<32x256xf32>
    %c0_13 = arith.constant 0 : index
    %c0_14 = arith.constant 0 : index
    %c0_15 = arith.constant 0 : index
    %22 = vector.load %arg4[%c0_13, %c0_14, %c0_15] : memref<1x32x256xf32, #tpu.memory_space<vmem>>, vector<1x32x256xf32>
    %23 = vector.shape_cast %22 : vector<1x32x256xf32> to vector<32x256xf32>
    %24 = arith.mulf %20, %23 : vector<32x256xf32>
    %25 = arith.mulf %19, %18 : vector<32x256xf32>
    %26 = arith.addf %24, %25 : vector<32x256xf32>
    %27 = math.tanh %26 : vector<32x256xf32>
    %28 = arith.mulf %21, %27 : vector<32x256xf32>
    %c0_16 = arith.constant 0 : index
    %c0_17 = arith.constant 0 : index
    %c0_18 = arith.constant 0 : index
    %29 = vector.load %arg8[%c0_16, %c0_17, %c0_18] : memref<1x32x256xf32, #tpu.memory_space<vmem>>, vector<1x32x256xf32>
    %30 = vector.shape_cast %29 : vector<1x32x256xf32> to vector<32x256xf32>
    %31 = vector.shape_cast %26 : vector<32x256xf32> to vector<1x32x256xf32>
    tpu.vector_store %arg8[%c0_16, %c0_17, %c0_18], %31 {strides = array<i32>} : memref<1x32x256xf32, #tpu.memory_space<vmem>>, vector<1x32x256xf32>,
    %c0_19 = arith.constant 0 : index
    %c0_20 = arith.constant 0 : index
    %c0_21 = arith.constant 0 : index
    %32 = vector.load %arg7[%c0_19, %c0_20, %c0_21] : memref<1x32x256xf32, #tpu.memory_space<vmem>>, vector<1x32x256xf32>
    %33 = vector.shape_cast %32 : vector<1x32x256xf32> to vector<32x256xf32>
    %34 = vector.shape_cast %28 : vector<32x256xf32> to vector<1x32x256xf32>
    tpu.vector_store %arg7[%c0_19, %c0_20, %c0_21], %34 {strides = array<i32>} : memref<1x32x256xf32, #tpu.memory_space<vmem>>, vector<1x32x256xf32>,
    return
  }
  func.func @transform_0(%arg0: i32, %arg1: i32) -> (i32, i32, i32) {
    %c0_i32 = arith.constant 0 : i32
    %c0_i32_0 = arith.constant 0 : i32
    return %arg0, %c0_i32, %arg1 : i32, i32, i32
  }
  func.func @transform_1(%arg0: i32, %arg1: i32) -> (i32, i32, i32) {
    %c0_i32 = arith.constant 0 : i32
    %c0_i32_0 = arith.constant 0 : i32
    return %arg0, %c0_i32, %arg1 : i32, i32, i32
  }
  func.func @transform_2(%arg0: i32, %arg1: i32) -> (i32, i32, i32) {
    %c0_i32 = arith.constant 0 : i32
    %c0_i32_0 = arith.constant 0 : i32
    return %arg0, %c0_i32, %arg1 : i32, i32, i32
  }
  func.func @transform_3(%arg0: i32, %arg1: i32) -> (i32, i32) {
    %c0_i32 = arith.constant 0 : i32
    %c0_i32_0 = arith.constant 0 : i32
    %c0_i32_1 = arith.constant 0 : i32
    return %c0_i32, %c0_i32_0 : i32, i32
  }
  func.func @transform_4(%arg0: i32, %arg1: i32) -> (i32, i32) {
    %c0_i32 = arith.constant 0 : i32
    %c0_i32_0 = arith.constant 0 : i32
    %c0_i32_1 = arith.constant 0 : i32
    return %c0_i32, %c0_i32_0 : i32, i32
  }
  func.func @transform_5(%arg0: i32, %arg1: i32) -> (i32, i32, i32) {
    %c0_i32 = arith.constant 0 : i32
    %c0_i32_0 = arith.constant 0 : i32
    return %arg0, %c0_i32, %arg1 : i32, i32, i32
  }
  func.func @transform_6(%arg0: i32, %arg1: i32) -> (i32, i32, i32) {
    %c0_i32 = arith.constant 0 : i32
    %c0_i32_0 = arith.constant 0 : i32
    return %arg0, %c0_i32, %arg1 : i32, i32, i32
  }
}

</mosaic_0001>

<llo_original>
// kernel: convlstm_forward.1
$region0: #{convlstm_forward.1}
  #allocation0 [shape = 'u32[]', space=smem, size = 0x4, offset = 0x4, fixed_abs, tag = 'smem constant byte address 0x4 - core index']
  #allocation1 [shape = 'u32[72,128]{1,0:T(1,128)}', space=vmem, size = 0x9000, scoped, tag = 'internal scratch']
  %s0 = inlined_call_operand.vmem [shape: f32[2,4,256], index: 0, kind: input, shape index: {}]
  %s1 = inlined_call_operand.vmem [shape: f32[2,32,256], index: 1, kind: input, shape index: {}]
  %s2 = inlined_call_operand.vmem [shape: f32[2,32,256], index: 2, kind: input, shape index: {}]
  %s3 = inlined_call_operand.vmem [shape: f32[128,4], index: 3, kind: input, shape index: {}]
  %s4 = inlined_call_operand.vmem [shape: f32[128,32], index: 4, kind: input, shape index: {}]
  %s5 = inlined_call_operand.vmem [shape: f32[2,32,256], index: 5, kind: output, shape index: {0}]
  %s6 = inlined_call_operand.vmem [shape: f32[2,32,256], index: 6, kind: output, shape index: {1}]
  %7 = xla_tuple %s5, %s6
  %s8 = sld [smem:[#allocation0]]
  $region61: #{convlstm_forward.1} parent=0
    _
  %s10 = ssub.s32 1, %s8
  %s11 = scalar_select 0, %s10, %s8
  loop: start=0, step=1, limit=4
  $region2: #{convlstm_forward.1} parent=0 // loop_pre_header
    _
  $region3: #{convlstm_forward.1} parent=0 // loop_header
    %s13 = sphi 0, %s17
    %p14 = scmp.ge.s32.totalorder %s13, 4
    %s20 = sphi 0, %s32
    %s21 = sphi 0, %s28
    %s22 = sphi 0, %s20
    %s23 = sphi 0, %s21
    %s24 = sphi 0, %s22
    %s25 = sphi 0, %s23
    %s37 = sphi 0, %s39
    %s40 = sphi 0, %s37
    %s41 = sphi 0, %s40
    %s57 = sphi 0, %s41
    %s65 = sphi 0, %s67
    %s68 = sphi 0, %s65
    %s69 = sphi 0, %s68
    %s85 = sphi 0, %s69
    %s93 = sphi 0, %s95
    %s96 = sphi 0, %s93
    %s97 = sphi 0, %s96
    %s113 = sphi 0, %s97
    %s117 = sphi 0, %s117
    %s119 = sphi 0, %s117
    %s120 = sphi 0, %s119
    %s134 = sphi 0, %s120
    %s138 = sphi 0, %s138
    %s140 = sphi 0, %s138
    %s141 = sphi 0, %s140
    %s155 = sphi 0, %s141
    %s163 = sphi 0, %s165
    %s166 = sphi 0, %s163
    %s167 = sphi 0, %s166
    %s183 = sphi 0, %s167
    %s191 = sphi 0, %s193
    %s194 = sphi 0, %s191
    %s195 = sphi 0, %s194
    %s211 = sphi 0, %s195
  $region4: #{convlstm_forward.1} parent=0 // loop_header_branch
    %16 = sbr.rel (%p14) target = $region8
  $region5: #{convlstm_forward.1} parent=0 // loop_body
    %s18 = ssub.s32 %s13, 1
    %s19 = ssub.s32 %s13, 2
    %s26 = sadd.s32 1, %s21
    %p27 = scmp.ge.s32.totalorder %s26, 1
    %s28 = scalar_select %p27, 0, %s26
    %s29 = sadd.s32 1, %s20
    %s30 = scalar_select %p27, %s29, %s20
    %p31 = scmp.ge.s32.totalorder %s30, 2
    %s32 = scalar_select %p31, 0, %s30
    %s33 = ssub.s32 %s20, %s32
    %s34 = ssub.s32 %s21, %s28
    %s35 = sor.u32 %s33, %s34
    %p36 = scmp.eq.s32.totalorder %s35, 0
    %s38 = sadd.s32 %s37, 1
    %s39 = scalar_select %p36, %s37, %s38
    %p42 = pneg %p36
    %p43 = scmp.eq.s32.totalorder %s13, 1
    %p44 = por %p42, %p43
    %p45 = scmp.ne.s32.totalorder %s37, %s40
    %p46 = scmp.eq.s32.totalorder %s13, 0
    %p47 = por %p45, %p46
    %p48 = scmp.ne.s32.totalorder %s37, %s40
    %p49 = scmp.eq.s32.totalorder %s18, 1
    %p50 = por %p48, %p49
    %p51 = scmp.ne.s32.totalorder %s40, %s41
    %p52 = scmp.eq.s32.totalorder %s18, 0
    %p53 = por %p51, %p52
    %p54 = scmp.ne.s32.totalorder %s40, %s41
    %p55 = scmp.eq.s32.totalorder %s19, 1
    %p56 = por %p54, %p55
    %p58 = scmp.ne.s32.totalorder %s41, %s57
    %p59 = scmp.eq.s32.totalorder %s19, 0
    %p60 = por %p58, %p59
    %s61 = ssub.s32 %s20, %s32
    %s62 = ssub.s32 %s21, %s28
    %s63 = sor.u32 %s61, %s62
    %p64 = scmp.eq.s32.totalorder %s63, 0
    %s66 = sadd.s32 %s65, 1
    %s67 = scalar_select %p64, %s65, %s66
    %p70 = pneg %p64
    %p71 = scmp.eq.s32.totalorder %s13, 1
    %p72 = por %p70, %p71
    %p73 = scmp.ne.s32.totalorder %s65, %s68
    %p74 = scmp.eq.s32.totalorder %s13, 0
    %p75 = por %p73, %p74
    %p76 = scmp.ne.s32.totalorder %s65, %s68
    %p77 = scmp.eq.s32.totalorder %s18, 1
    %p78 = por %p76, %p77
    %p79 = scmp.ne.s32.totalorder %s68, %s69
    %p80 = scmp.eq.s32.totalorder %s18, 0
    %p81 = por %p79, %p80
    %p82 = scmp.ne.s32.totalorder %s68, %s69
    %p83 = scmp.eq.s32.totalorder %s19, 1
    %p84 = por %p82, %p83
    %p86 = scmp.ne.s32.totalorder %s69, %s85
    %p87 = scmp.eq.s32.totalorder %s19, 0
    %p88 = por %p86, %p87
    %s89 = ssub.s32 %s20, %s32
    %s90 = ssub.s32 %s21, %s28
    %s91 = sor.u32 %s89, %s90
    %p92 = scmp.eq.s32.totalorder %s91, 0
    %s94 = sadd.s32 %s93, 1
    %s95 = scalar_select %p92, %s93, %s94
    %p98 = pneg %p92
    %p99 = scmp.eq.s32.totalorder %s13, 1
    %p100 = por %p98, %p99
    %p101 = scmp.ne.s32.totalorder %s93, %s96
    %p102 = scmp.eq.s32.totalorder %s13, 0
    %p103 = por %p101, %p102
    %p104 = scmp.ne.s32.totalorder %s93, %s96
    %p105 = scmp.eq.s32.totalorder %s18, 1
    %p106 = por %p104, %p105
    %p107 = scmp.ne.s32.totalorder %s96, %s97
    %p108 = scmp.eq.s32.totalorder %s18, 0
    %p109 = por %p107, %p108
    %p110 = scmp.ne.s32.totalorder %s96, %s97
    %p111 = scmp.eq.s32.totalorder %s19, 1
    %p112 = por %p110, %p111
    %p114 = scmp.ne.s32.totalorder %s97, %s113
    %p115 = scmp.eq.s32.totalorder %s19, 0
    %p116 = por %p114, %p115
    %s118 = sadd.s32 %s117, 1
    %p121 = scmp.eq.s32.totalorder %s13, 1
    %p122 = scmp.ne.s32.totalorder %s117, %s119
    %p123 = scmp.eq.s32.totalorder %s13, 0
    %p124 = por %p122, %p123
    %p125 = scmp.ne.s32.totalorder %s117, %s119
    %p126 = scmp.eq.s32.totalorder %s18, 1
    %p127 = por %p125, %p126
    %p128 = scmp.ne.s32.totalorder %s119, %s120
    %p129 = scmp.eq.s32.totalorder %s18, 0
    %p130 = por %p128, %p129
    %p131 = scmp.ne.s32.totalorder %s119, %s120
    %p132 = scmp.eq.s32.totalorder %s19, 1
    %p133 = por %p131, %p132
    %p135 = scmp.ne.s32.totalorder %s120, %s134
    %p136 = scmp.eq.s32.totalorder %s19, 0
    %p137 = por %p135, %p136
    %s139 = sadd.s32 %s138, 1
    %p142 = scmp.eq.s32.totalorder %s13, 1
    %p143 = scmp.ne.s32.totalorder %s138, %s140
    %p144 = scmp.eq.s32.totalorder %s13, 0
    %p145 = por %p143, %p144
    %p146 = scmp.ne.s32.totalorder %s138, %s140
    %p147 = scmp.eq.s32.totalorder %s18, 1
    %p148 = por %p146, %p147
    %p149 = scmp.ne.s32.totalorder %s140, %s141
    %p150 = scmp.eq.s32.totalorder %s18, 0
    %p151 = por %p149, %p150
    %p152 = scmp.ne.s32.totalorder %s140, %s141
    %p153 = scmp.eq.s32.totalorder %s19, 1
    %p154 = por %p152, %p153
    %p156 = scmp.ne.s32.totalorder %s141, %s155
    %p157 = scmp.eq.s32.totalorder %s19, 0
    %p158 = por %p156, %p157
    %s159 = ssub.s32 %s20, %s32
    %s160 = ssub.s32 %s21, %s28
    %s161 = sor.u32 %s159, %s160
    %p162 = scmp.eq.s32.totalorder %s161, 0
    %s164 = sadd.s32 %s163, 1
    %s165 = scalar_select %p162, %s163, %s164
    %p168 = pneg %p162
    %p169 = scmp.eq.s32.totalorder %s13, 1
    %p170 = por %p168, %p169
    %p171 = scmp.ne.s32.totalorder %s163, %s166
    %p172 = scmp.eq.s32.totalorder %s13, 0
    %p173 = por %p171, %p172
    %p174 = scmp.ne.s32.totalorder %s163, %s166
    %p175 = scmp.eq.s32.totalorder %s18, 1
    %p176 = por %p174, %p175
    %p177 = scmp.ne.s32.totalorder %s166, %s167
    %p178 = scmp.eq.s32.totalorder %s18, 0
    %p179 = por %p177, %p178
    %p180 = scmp.ne.s32.totalorder %s166, %s167
    %p181 = scmp.eq.s32.totalorder %s19, 1
    %p182 = por %p180, %p181
    %p184 = scmp.ne.s32.totalorder %s167, %s183
    %p185 = scmp.eq.s32.totalorder %s19, 0
    %p186 = por %p184, %p185
    %s187 = ssub.s32 %s20, %s32
    %s188 = ssub.s32 %s21, %s28
    %s189 = sor.u32 %s187, %s188
    %p190 = scmp.eq.s32.totalorder %s189, 0
    %s192 = sadd.s32 %s191, 1
    %s193 = scalar_select %p190, %s191, %s192
    %p196 = pneg %p190
    %p197 = scmp.eq.s32.totalorder %s13, 1
    %p198 = por %p196, %p197
    %p199 = scmp.ne.s32.totalorder %s191, %s194
    %p200 = scmp.eq.s32.totalorder %s13, 0
    %p201 = por %p199, %p200
    %p202 = scmp.ne.s32.totalorder %s191, %s194
    %p203 = scmp.eq.s32.totalorder %s18, 1
    %p204 = por %p202, %p203
    %p205 = scmp.ne.s32.totalorder %s194, %s195
    %p206 = scmp.eq.s32.totalorder %s18, 0
    %p207 = por %p205, %p206
    %p208 = scmp.ne.s32.totalorder %s194, %s195
    %p209 = scmp.eq.s32.totalorder %s19, 1
    %p210 = por %p208, %p209
    %p212 = scmp.ne.s32.totalorder %s195, %s211
    %p213 = scmp.eq.s32.totalorder %s19, 0
    %p214 = por %p212, %p213
    %p215 = scmp.le.s32.totalorder 1, %s13
    %p216 = scmp.lt.s32.totalorder %s13, 3
    %p217 = pnand %p215, %p216
    %p218 = pneg %p217
    // Predicated region
    $region9: #{convlstm_forward.1} parent=5 // pred_check
      _
    $region10: #{convlstm_forward.1} parent=5 // pred_check_branch
      %220 = sbr.rel (%p217) target = $region12
    $region11: #{convlstm_forward.1} parent=5 // pred_region
      %s221 = ssub.s32 %s13, 1
      // Predicated region
      $region13: #{convlstm_forward.1} parent=11 // pred_check
        %p222 = pneg %p130
      $region14: #{convlstm_forward.1} parent=11 // pred_check_branch
        %224 = sbr.rel (%p222) target = $region16
      $region15: #{convlstm_forward.1} parent=11 // pred_region
        _
      $region16: #{convlstm_forward.1} parent=11 // pred_fallthru
        _
      // Predicated region
      $region17: #{convlstm_forward.1} parent=11 // pred_check
        %p225 = pneg %p151
      $region18: #{convlstm_forward.1} parent=11 // pred_check_branch
        %227 = sbr.rel (%p225) target = $region20
      $region19: #{convlstm_forward.1} parent=11 // pred_region
        _
      $region20: #{convlstm_forward.1} parent=11 // pred_fallthru
        _
    $region12: #{convlstm_forward.1} parent=5 // pred_fallthru
      _
    %p228 = scmp.lt.s32.totalorder %s13, 2
    // Predicated region
    $region21: #{convlstm_forward.1} parent=5 // pred_check
      %p229 = pneg %p228
    $region22: #{convlstm_forward.1} parent=5 // pred_check_branch
      %231 = sbr.rel (%p229) target = $region24
    $region23: #{convlstm_forward.1} parent=5 // pred_region
      // Predicated region
      $region25: #{convlstm_forward.1} parent=23 // pred_check
        %p232 = pneg %p47
      $region26: #{convlstm_forward.1} parent=23 // pred_check_branch
        %234 = sbr.rel (%p232) target = $region28
      $region27: #{convlstm_forward.1} parent=23 // pred_region
        %s235 = smul.u32 2, %s21
        %p236 = scmp.lt.s32.totalorder %s20, 1
        %s237 = scalar_select %p236, %s20, 1
        %p238 = scmp.lt.s32.totalorder %s235, 1
        %s239 = scalar_select %p238, %s235, 1
        %s240 = smul.addr %s237, 2
        %s241 = sadd.s32 %s239, %s240
        %s242 = smul.addr %s241, 4
        %s243 = scalar_lea.vmem %s0, %s242
        %s244 = smul.u32 2, %s21
      $region28: #{convlstm_forward.1} parent=23 // pred_fallthru
        _
      // Predicated region
      $region29: #{convlstm_forward.1} parent=23 // pred_check
        %p245 = pneg %p75
      $region30: #{convlstm_forward.1} parent=23 // pred_check_branch
        %247 = sbr.rel (%p245) target = $region32
      $region31: #{convlstm_forward.1} parent=23 // pred_region
        %s248 = smul.u32 2, %s21
        %p249 = scmp.lt.s32.totalorder %s20, 1
        %s250 = scalar_select %p249, %s20, 1
        %p251 = scmp.lt.s32.totalorder %s248, 1
        %s252 = scalar_select %p251, %s248, 1
        %s253 = smul.addr %s250, 8
        %s254 = sadd.s32 %s252, %s253
        %s255 = smul.addr %s254, 8
        %s256 = scalar_lea.vmem %s1, %s255
        %s257 = smul.u32 2, %s21
      $region32: #{convlstm_forward.1} parent=23 // pred_fallthru
        _
      // Predicated region
      $region33: #{convlstm_forward.1} parent=23 // pred_check
        %p258 = pneg %p103
      $region34: #{convlstm_forward.1} parent=23 // pred_check_branch
        %260 = sbr.rel (%p258) target = $region36
      $region35: #{convlstm_forward.1} parent=23 // pred_region
        %s261 = smul.u32 2, %s21
        %p262 = scmp.lt.s32.totalorder %s20, 1
        %s263 = scalar_select %p262, %s20, 1
        %p264 = scmp.lt.s32.totalorder %s261, 1
        %s265 = scalar_select %p264, %s261, 1
        %s266 = smul.addr %s263, 8
        %s267 = sadd.s32 %s265, %s266
        %s268 = smul.addr %s267, 8
        %s269 = scalar_lea.vmem %s2, %s268
        %s270 = smul.u32 2, %s21
      $region36: #{convlstm_forward.1} parent=23 // pred_fallthru
        _
    $region24: #{convlstm_forward.1} parent=5 // pred_fallthru
      _
    %p271 = scmp.le.s32.totalorder 1, %s13
    %p272 = scmp.lt.s32.totalorder %s13, 3
    %p273 = pnand %p271, %p272
    %p274 = pneg %p273
    // Predicated region
    $region37: #{convlstm_forward.1} parent=5 // pred_check
      _
    $region38: #{convlstm_forward.1} parent=5 // pred_check_branch
      %276 = sbr.rel (%p273) target = $region40
    $region39: #{convlstm_forward.1} parent=5 // pred_region
      %s277 = ssub.s32 %s13, 1
      %s278 = smul.u32 2, %s23
      %p279 = scmp.lt.s32.totalorder %s22, 1
      %s280 = scalar_select %p279, %s22, 1
      %p281 = scmp.lt.s32.totalorder %s278, 1
      %s282 = scalar_select %p281, %s278, 1
      %s283 = smul.addr %s280, 2
      %s284 = sadd.s32 %s282, %s283
      %s285 = smul.addr %s284, 4
      %s286 = scalar_lea.vmem %s0, %s285
      %p287 = pneg %p53
      %p288 = pneg %p50
      %s289 = smul.u32 2, %s23
      %p290 = scmp.lt.s32.totalorder %s22, 1
      %s291 = scalar_select %p290, %s22, 1
      %p292 = scmp.lt.s32.totalorder %s289, 1
      %s293 = scalar_select %p292, %s289, 1
      %s294 = smul.addr %s291, 8
      %s295 = sadd.s32 %s293, %s294
      %s296 = smul.addr %s295, 8
      %s297 = scalar_lea.vmem %s1, %s296
      %p298 = pneg %p81
      %p299 = pneg %p78
      %s300 = smul.u32 2, %s23
      %p301 = scmp.lt.s32.totalorder %s22, 1
      %s302 = scalar_select %p301, %s22, 1
      %p303 = scmp.lt.s32.totalorder %s300, 1
      %s304 = scalar_select %p303, %s300, 1
      %s305 = smul.addr %s302, 8
      %s306 = sadd.s32 %s304, %s305
      %s307 = smul.addr %s306, 8
      %s308 = scalar_lea.vmem %s2, %s307
      %p309 = pneg %p109
      %p310 = pneg %p106
      %p311 = pneg %p130
      %p312 = pneg %p127
      %p313 = pneg %p151
      %p314 = pneg %p148
      %p315 = pneg %p179
      %p316 = pneg %p176
      %s317 = smul.u32 2, %s23
      %p318 = scmp.lt.s32.totalorder %s22, 1
      %s319 = scalar_select %p318, %s22, 1
      %p320 = scmp.lt.s32.totalorder %s317, 1
      %s321 = scalar_select %p320, %s317, 1
      %s322 = smul.addr %s319, 8
      %s323 = sadd.s32 %s321, %s322
      %s324 = smul.addr %s323, 8
      %s325 = scalar_lea.vmem %s5, %s324
      %p326 = pneg %p207
      %p327 = pneg %p204
      %s328 = smul.u32 2, %s23
      %p329 = scmp.lt.s32.totalorder %s22, 1
      %s330 = scalar_select %p329, %s22, 1
      %p331 = scmp.lt.s32.totalorder %s328, 1
      %s332 = scalar_select %p331, %s328, 1
      %s333 = smul.addr %s330, 8
      %s334 = sadd.s32 %s332, %s333
      %s335 = smul.addr %s334, 8
      %s336 = scalar_lea.vmem %s6, %s335
      %s337 = smul.u32 2, %s23
      %p338 = scmp.lt.s32.totalorder %s22, 1
      %s339 = scalar_select %p338, %s22, 1
      %p340 = scmp.lt.s32.totalorder %s337, 1
      %s341 = scalar_select %p340, %s337, 1
      %s342 = smul.addr %s339, 2
      %s343 = sadd.s32 %s341, %s342
      %s344 = smul.addr %s343, 4
      %s345 = scalar_lea.vmem %s0, %s344
      %s346 = smul.u32 2, %s23
      %s347 = smul.u32 2, %s23
      %p348 = scmp.lt.s32.totalorder %s22, 1
      %s349 = scalar_select %p348, %s22, 1
      %p350 = scmp.lt.s32.totalorder %s347, 1
      %s351 = scalar_select %p350, %s347, 1
      %s352 = smul.addr %s349, 8
      %s353 = sadd.s32 %s351, %s352
      %s354 = smul.addr %s353, 8
      %s355 = scalar_lea.vmem %s1, %s354
      %s356 = smul.u32 2, %s23
      %s357 = smul.u32 2, %s23
      %p358 = scmp.lt.s32.totalorder %s22, 1
      %s359 = scalar_select %p358, %s22, 1
      %p360 = scmp.lt.s32.totalorder %s357, 1
      %s361 = scalar_select %p360, %s357, 1
      %s362 = smul.addr %s359, 8
      %s363 = sadd.s32 %s361, %s362
      %s364 = smul.addr %s363, 8
      %s365 = scalar_lea.vmem %s2, %s364
      %s366 = smul.u32 2, %s23
      %s367 = smul.u32 2, %s23
      %p368 = scmp.lt.s32.totalorder %s22, 1
      %s369 = scalar_select %p368, %s22, 1
      %p370 = scmp.lt.s32.totalorder %s367, 1
      %s371 = scalar_select %p370, %s367, 1
      %s372 = smul.addr %s369, 8
      %s373 = sadd.s32 %s371, %s372
      %s374 = smul.addr %s373, 8
      %s375 = scalar_lea.vmem %s5, %s374
      %s376 = smul.u32 2, %s23
      %s377 = smul.u32 2, %s23
      %p378 = scmp.lt.s32.totalorder %s22, 1
      %s379 = scalar_select %p378, %s22, 1
      %p380 = scmp.lt.s32.totalorder %s377, 1
      %s381 = scalar_select %p380, %s377, 1
      %s382 = smul.addr %s379, 8
      %s383 = sadd.s32 %s381, %s382
      %s384 = smul.addr %s383, 8
      %s385 = scalar_lea.vmem %s6, %s384
      %s386 = smul.u32 2, %s23
      %v387 = vld [vmem:[%s345] sm:$0xff]
      %v388 = vld [vmem:[%s355] sm:$0xff]
      %v389 = vld [vmem:[%s355 + $0x8] sm:$0xff]
      %v390 = vld [vmem:[%s355 + $0x10] sm:$0xff]
      %v391 = vld [vmem:[%s355 + $0x18] sm:$0xff]
      %v392 = vld [vmem:[%s355 + $0x20] sm:$0xff]
      %v393 = vld [vmem:[%s355 + $0x28] sm:$0xff]
      %v394 = vld [vmem:[%s355 + $0x30] sm:$0xff]
      %v395 = vld [vmem:[%s355 + $0x38] sm:$0xff]
      %v396 = vld [vmem:[%s3] sm:$0xff]
      %v397 = vld [vmem:[%s3 + $0x8] sm:$0xff]
      %v398 = vld [vmem:[%s3 + $0x10] sm:$0xff]
      %v399 = vld [vmem:[%s3 + $0x18] sm:$0xff]
      %v400 = vld [vmem:[%s3 + $0x20] sm:$0xff]
      %v401 = vld [vmem:[%s3 + $0x28] sm:$0xff]
      %v402 = vld [vmem:[%s3 + $0x30] sm:$0xff]
      %v403 = vld [vmem:[%s3 + $0x38] sm:$0xff]
      %v404 = vld [vmem:[%s3 + $0x40] sm:$0xff]
      %v405 = vld [vmem:[%s3 + $0x48] sm:$0xff]
      %v406 = vld [vmem:[%s3 + $0x50] sm:$0xff]
      %v407 = vld [vmem:[%s3 + $0x58] sm:$0xff]
      %v408 = vld [vmem:[%s3 + $0x60] sm:$0xff]
      %v409 = vld [vmem:[%s3 + $0x68] sm:$0xff]
      %v410 = vld [vmem:[%s3 + $0x70] sm:$0xff]
      %v411 = vld [vmem:[%s3 + $0x78] sm:$0xff]
      %v412 = vld [vmem:[%s4] sm:$0xff]
      %v413 = vld [vmem:[%s4 + $0x8] sm:$0xff]
      %v414 = vld [vmem:[%s4 + $0x10] sm:$0xff]
      %v415 = vld [vmem:[%s4 + $0x18] sm:$0xff]
      %v416 = vld [vmem:[%s4 + $0x20] sm:$0xff]
      %v417 = vld [vmem:[%s4 + $0x28] sm:$0xff]
      %v418 = vld [vmem:[%s4 + $0x30] sm:$0xff]
      %v419 = vld [vmem:[%s4 + $0x38] sm:$0xff]
      %v420 = vld [vmem:[%s4 + $0x40] sm:$0xff]
      %v421 = vld [vmem:[%s4 + $0x48] sm:$0xff]
      %v422 = vld [vmem:[%s4 + $0x50] sm:$0xff]
      %v423 = vld [vmem:[%s4 + $0x58] sm:$0xff]
      %v424 = vld [vmem:[%s4 + $0x60] sm:$0xff]
      %v425 = vld [vmem:[%s4 + $0x68] sm:$0xff]
      %v426 = vld [vmem:[%s4 + $0x70] sm:$0xff]
      %v427 = vld [vmem:[%s4 + $0x78] sm:$0xff]
      %vm428 = vcmask 261120
      %v430 = vsel %vm428, %v412, 0
      %v433 = vsel %vm428, %v413, 0
      %v436 = vsel %vm428, %v414, 0
      %v439 = vsel %vm428, %v415, 0
      %v442 = vsel %vm428, %v416, 0
      %v445 = vsel %vm428, %v417, 0
      %v448 = vsel %vm428, %v418, 0
      %v451 = vsel %vm428, %v419, 0
      %v454 = vsel %vm428, %v420, 0
      %v457 = vsel %vm428, %v421, 0
      %v460 = vsel %vm428, %v422, 0
      %v463 = vsel %vm428, %v423, 0
      %v466 = vsel %vm428, %v424, 0
      %v469 = vsel %vm428, %v425, 0
      %v472 = vsel %vm428, %v426, 0
      %v475 = vsel %vm428, %v427, 0
      %477 = vmatpush.msra.mxu0 0.0
      %478 = vmatpush.msra.mxu0 0.0
      %479 = vmatpush.msra.mxu0 0.0
      %480 = vmatpush.msra.mxu0 0.0
      %481 = vmatpush.msra.mxu0 0.0
      %482 = vmatpush.msra.mxu0 0.0
      %483 = vmatpush.msra.mxu0 0.0
      %484 = vmatpush.msra.mxu0 0.0
      %485 = vmatpush.msra.mxu0 0.0
      %486 = vmatpush.msra.mxu0 0.0
      %487 = vmatpush.msra.mxu0 0.0
      %488 = vmatpush.msra.mxu0 0.0
      %489 = vmatpush.msra.mxu0 %v394
      %490 = vmatpush.msra.mxu0 %v392
      %491 = vmatpush.msra.mxu0 %v390
      %492 = vmatpush.msra.mxu0 %v388
      %493 = vmatmul.f32.gmra.mxu0 %v430
      %v494 = vpop.f32.mrf.mxu0
      %v495 = vadd.f32 0.0, %v494
      %496 = vmatmul.f32.gmra.mxu0 %v433
      %v497 = vpop.f32.mrf.mxu0
      %v498 = vadd.f32 0.0, %v497
      %499 = vmatmul.f32.gmra.mxu0 %v436
      %v500 = vpop.f32.mrf.mxu0
      %v501 = vadd.f32 0.0, %v500
      %502 = vmatmul.f32.gmra.mxu0 %v439
      %v503 = vpop.f32.mrf.mxu0
      %v504 = vadd.f32 0.0, %v503
      %505 = vmatmul.f32.gmra.mxu0 %v442
      %v506 = vpop.f32.mrf.mxu0
      %v507 = vadd.f32 0.0, %v506
      %508 = vmatmul.f32.gmra.mxu0 %v445
      %v509 = vpop.f32.mrf.mxu0
      %v510 = vadd.f32 0.0, %v509
      %511 = vmatmul.f32.gmra.mxu0 %v448
      %v512 = vpop.f32.mrf.mxu0
      %v513 = vadd.f32 0.0, %v512
      %514 = vmatmul.f32.gmra.mxu0 %v451
      %v515 = vpop.f32.mrf.mxu0
      %v516 = vadd.f32 0.0, %v515
      %517 = vmatmul.f32.gmra.mxu0 %v454
      %v518 = vpop.f32.mrf.mxu0
      %v519 = vadd.f32 0.0, %v518
      %520 = vmatmul.f32.gmra.mxu0 %v457
      %v521 = vpop.f32.mrf.mxu0
      %v522 = vadd.f32 0.0, %v521
      %523 = vmatmul.f32.gmra.mxu0 %v460
      %v524 = vpop.f32.mrf.mxu0
      %v525 = vadd.f32 0.0, %v524
      %526 = vmatmul.f32.gmra.mxu0 %v463
      %v527 = vpop.f32.mrf.mxu0
      %v528 = vadd.f32 0.0, %v527
      %529 = vmatmul.f32.gmra.mxu0 %v466
      %v530 = vpop.f32.mrf.mxu0
      %v531 = vadd.f32 0.0, %v530
      %532 = vmatmul.f32.gmra.mxu0 %v469
      %v533 = vpop.f32.mrf.mxu0
      %v534 = vadd.f32 0.0, %v533
      %535 = vmatmul.f32.gmra.mxu0 %v472
      %v536 = vpop.f32.mrf.mxu0
      %v537 = vadd.f32 0.0, %v536
      %538 = vmatmul.f32.gmra.mxu0 %v475
      %v539 = vpop.f32.mrf.mxu0
      %v540 = vadd.f32 0.0, %v539
      %541 = vdwg.mxu0
      %542 = vmatpush.msra.mxu0 0.0
      %543 = vmatpush.msra.mxu0 0.0
      %544 = vmatpush.msra.mxu0 0.0
      %545 = vmatpush.msra.mxu0 0.0
      %546 = vmatpush.msra.mxu0 0.0
      %547 = vmatpush.msra.mxu0 0.0
      %548 = vmatpush.msra.mxu0 0.0
      %549 = vmatpush.msra.mxu0 0.0
      %550 = vmatpush.msra.mxu0 0.0
      %551 = vmatpush.msra.mxu0 0.0
      %552 = vmatpush.msra.mxu0 0.0
      %553 = vmatpush.msra.mxu0 0.0
      %554 = vmatpush.msra.mxu0 %v395
      %555 = vmatpush.msra.mxu0 %v393
      %556 = vmatpush.msra.mxu0 %v391
      %557 = vmatpush.msra.mxu0 %v389
      %558 = vmatmul.f32.gmra.mxu0 %v430
      %v559 = vpop.f32.mrf.mxu0
      %v560 = vadd.f32 0.0, %v559
      %561 = vmatmul.f32.gmra.mxu0 %v433
      %v562 = vpop.f32.mrf.mxu0
      %v563 = vadd.f32 0.0, %v562
      %564 = vmatmul.f32.gmra.mxu0 %v436
      %v565 = vpop.f32.mrf.mxu0
      %v566 = vadd.f32 0.0, %v565
      %567 = vmatmul.f32.gmra.mxu0 %v439
      %v568 = vpop.f32.mrf.mxu0
      %v569 = vadd.f32 0.0, %v568
      %570 = vmatmul.f32.gmra.mxu0 %v442
      %v571 = vpop.f32.mrf.mxu0
      %v572 = vadd.f32 0.0, %v571
      %573 = vmatmul.f32.gmra.mxu0 %v445
      %v574 = vpop.f32.mrf.mxu0
      %v575 = vadd.f32 0.0, %v574
      %576 = vmatmul.f32.gmra.mxu0 %v448
      %v577 = vpop.f32.mrf.mxu0
      %v578 = vadd.f32 0.0, %v577
      %579 = vmatmul.f32.gmra.mxu0 %v451
      %v580 = vpop.f32.mrf.mxu0
      %v581 = vadd.f32 0.0, %v580
      %582 = vmatmul.f32.gmra.mxu0 %v454
      %v583 = vpop.f32.mrf.mxu0
      %v584 = vadd.f32 0.0, %v583
      %585 = vmatmul.f32.gmra.mxu0 %v457
      %v586 = vpop.f32.mrf.mxu0
      %v587 = vadd.f32 0.0, %v586
      %588 = vmatmul.f32.gmra.mxu0 %v460
      %v589 = vpop.f32.mrf.mxu0
      %v590 = vadd.f32 0.0, %v589
      %591 = vmatmul.f32.gmra.mxu0 %v463
      %v592 = vpop.f32.mrf.mxu0
      %v593 = vadd.f32 0.0, %v592
      %594 = vmatmul.f32.gmra.mxu0 %v466
      %v595 = vpop.f32.mrf.mxu0
      %v596 = vadd.f32 0.0, %v595
      %597 = vmatmul.f32.gmra.mxu0 %v469
      %v598 = vpop.f32.mrf.mxu0
      %v599 = vadd.f32 0.0, %v598
      %600 = vmatmul.f32.gmra.mxu0 %v472
      %v601 = vpop.f32.mrf.mxu0
      %v602 = vadd.f32 0.0, %v601
      %603 = vmatmul.f32.gmra.mxu0 %v475
      %v604 = vpop.f32.mrf.mxu0
      %v605 = vadd.f32 0.0, %v604
      %606 = vdwg.mxu0
      %608 = vst [vmem:[#allocation1] ss:$2 sm:$0xff] %v387
      %v609 = vld.sshfl [vmem:[#allocation1] sm:$0xff pattern:$0x75316420]
      %v610 = vld.sshfl [vmem:[#allocation1 + $0x8] sm:$0xff pattern:$0x75316420]
      %vm611 = vcmask 31744
      %v613 = vsel %vm611, %v396, 0
      %v616 = vsel %vm611, %v397, 0
      %v619 = vsel %vm611, %v398, 0
      %v622 = vsel %vm611, %v399, 0
      %v625 = vsel %vm611, %v400, 0
      %v628 = vsel %vm611, %v401, 0
      %v631 = vsel %vm611, %v402, 0
      %v634 = vsel %vm611, %v403, 0
      %v637 = vsel %vm611, %v404, 0
      %v640 = vsel %vm611, %v405, 0
      %v643 = vsel %vm611, %v406, 0
      %v646 = vsel %vm611, %v407, 0
      %v649 = vsel %vm611, %v408, 0
      %v652 = vsel %vm611, %v409, 0
      %v655 = vsel %vm611, %v410, 0
      %v658 = vsel %vm611, %v411, 0
      %vm660 = vcmask 1043456
      %v661 = vsel %vm660, %v609, 0
      %v663 = vsel %vm660, %v610, 0
      %665 = vmatpush.msra.mxu0 0.0
      %666 = vmatpush.msra.mxu0 0.0
      %667 = vmatpush.msra.mxu0 0.0
      %668 = vmatpush.msra.mxu0 0.0
      %669 = vmatpush.msra.mxu0 0.0
      %670 = vmatpush.msra.mxu0 0.0
      %671 = vmatpush.msra.mxu0 0.0
      %672 = vmatpush.msra.mxu0 0.0
      %673 = vmatpush.msra.mxu0 0.0
      %674 = vmatpush.msra.mxu0 0.0
      %675 = vmatpush.msra.mxu0 0.0
      %676 = vmatpush.msra.mxu0 0.0
      %677 = vmatpush.msra.mxu0 0.0
      %678 = vmatpush.msra.mxu0 0.0
      %679 = vmatpush.msra.mxu0 0.0
      %680 = vmatpush.msra.mxu0 %v661
      %681 = vmatmul.f32.gmra.mxu0 %v613
      %v682 = vpop.f32.mrf.mxu0
      %v683 = vadd.f32 %v495, %v682
      %684 = vmatmul.f32.gmra.mxu0 %v616
      %v685 = vpop.f32.mrf.mxu0
      %v686 = vadd.f32 %v498, %v685
      %687 = vmatmul.f32.gmra.mxu0 %v619
      %v688 = vpop.f32.mrf.mxu0
      %v689 = vadd.f32 %v501, %v688
      %690 = vmatmul.f32.gmra.mxu0 %v622
      %v691 = vpop.f32.mrf.mxu0
      %v692 = vadd.f32 %v504, %v691
      %693 = vmatmul.f32.gmra.mxu0 %v625
      %v694 = vpop.f32.mrf.mxu0
      %v695 = vadd.f32 %v507, %v694
      %696 = vmatmul.f32.gmra.mxu0 %v628
      %v697 = vpop.f32.mrf.mxu0
      %v698 = vadd.f32 %v510, %v697
      %699 = vmatmul.f32.gmra.mxu0 %v631
      %v700 = vpop.f32.mrf.mxu0
      %v701 = vadd.f32 %v513, %v700
      %702 = vmatmul.f32.gmra.mxu0 %v634
      %v703 = vpop.f32.mrf.mxu0
      %v704 = vadd.f32 %v516, %v703
      %705 = vmatmul.f32.gmra.mxu0 %v637
      %v706 = vpop.f32.mrf.mxu0
      %v707 = vadd.f32 %v519, %v706
      %708 = vmatmul.f32.gmra.mxu0 %v640
      %v709 = vpop.f32.mrf.mxu0
      %v710 = vadd.f32 %v522, %v709
      %711 = vmatmul.f32.gmra.mxu0 %v643
      %v712 = vpop.f32.mrf.mxu0
      %v713 = vadd.f32 %v525, %v712
      %714 = vmatmul.f32.gmra.mxu0 %v646
      %v715 = vpop.f32.mrf.mxu0
      %v716 = vadd.f32 %v528, %v715
      %717 = vmatmul.f32.gmra.mxu0 %v649
      %v718 = vpop.f32.mrf.mxu0
      %v719 = vadd.f32 %v531, %v718
      %720 = vmatmul.f32.gmra.mxu0 %v652
      %v721 = vpop.f32.mrf.mxu0
      %v722 = vadd.f32 %v534, %v721
      %723 = vmatmul.f32.gmra.mxu0 %v655
      %v724 = vpop.f32.mrf.mxu0
      %v725 = vadd.f32 %v537, %v724
      %726 = vmatmul.f32.gmra.mxu0 %v658
      %v727 = vpop.f32.mrf.mxu0
      %v728 = vadd.f32 %v540, %v727
      %729 = vdwg.mxu0
      %730 = vmatpush.msra.mxu0 0.0
      %731 = vmatpush.msra.mxu0 0.0
      %732 = vmatpush.msra.mxu0 0.0
      %733 = vmatpush.msra.mxu0 0.0
      %734 = vmatpush.msra.mxu0 0.0
      %735 = vmatpush.msra.mxu0 0.0
      %736 = vmatpush.msra.mxu0 0.0
      %737 = vmatpush.msra.mxu0 0.0
      %738 = vmatpush.msra.mxu0 0.0
      %739 = vmatpush.msra.mxu0 0.0
      %740 = vmatpush.msra.mxu0 0.0
      %741 = vmatpush.msra.mxu0 0.0
      %742 = vmatpush.msra.mxu0 0.0
      %743 = vmatpush.msra.mxu0 0.0
      %744 = vmatpush.msra.mxu0 0.0
      %745 = vmatpush.msra.mxu0 %v663
      %746 = vmatmul.f32.gmra.mxu0 %v613
      %v747 = vpop.f32.mrf.mxu0
      %v748 = vadd.f32 %v560, %v747
      %749 = vmatmul.f32.gmra.mxu0 %v616
      %v750 = vpop.f32.mrf.mxu0
      %v751 = vadd.f32 %v563, %v750
      %752 = vmatmul.f32.gmra.mxu0 %v619
      %v753 = vpop.f32.mrf.mxu0
      %v754 = vadd.f32 %v566, %v753
      %755 = vmatmul.f32.gmra.mxu0 %v622
      %v756 = vpop.f32.mrf.mxu0
      %v757 = vadd.f32 %v569, %v756
      %758 = vmatmul.f32.gmra.mxu0 %v625
      %v759 = vpop.f32.mrf.mxu0
      %v760 = vadd.f32 %v572, %v759
      %761 = vmatmul.f32.gmra.mxu0 %v628
      %v762 = vpop.f32.mrf.mxu0
      %v763 = vadd.f32 %v575, %v762
      %764 = vmatmul.f32.gmra.mxu0 %v631
      %v765 = vpop.f32.mrf.mxu0
      %v766 = vadd.f32 %v578, %v765
      %767 = vmatmul.f32.gmra.mxu0 %v634
      %v768 = vpop.f32.mrf.mxu0
      %v769 = vadd.f32 %v581, %v768
      %770 = vmatmul.f32.gmra.mxu0 %v637
      %v771 = vpop.f32.mrf.mxu0
      %v772 = vadd.f32 %v584, %v771
      %773 = vmatmul.f32.gmra.mxu0 %v640
      %v774 = vpop.f32.mrf.mxu0
      %v775 = vadd.f32 %v587, %v774
      %776 = vmatmul.f32.gmra.mxu0 %v643
      %v777 = vpop.f32.mrf.mxu0
      %v778 = vadd.f32 %v590, %v777
      %779 = vmatmul.f32.gmra.mxu0 %v646
      %v780 = vpop.f32.mrf.mxu0
      %v781 = vadd.f32 %v593, %v780
      %782 = vmatmul.f32.gmra.mxu0 %v649
      %v783 = vpop.f32.mrf.mxu0
      %v784 = vadd.f32 %v596, %v783
      %785 = vmatmul.f32.gmra.mxu0 %v652
      %v786 = vpop.f32.mrf.mxu0
      %v787 = vadd.f32 %v599, %v786
      %788 = vmatmul.f32.gmra.mxu0 %v655
      %v789 = vpop.f32.mrf.mxu0
      %v790 = vadd.f32 %v602, %v789
      %791 = vmatmul.f32.gmra.mxu0 %v658
      %v792 = vpop.f32.mrf.mxu0
      %v793 = vadd.f32 %v605, %v792
      %794 = vdwg.mxu0
      %v795 = vmul.f32 %v683, 0.5
      %v796 = vmul.f32 %v748, 0.5
      %v797 = vmul.f32 %v686, 0.5
      %v798 = vmul.f32 %v751, 0.5
      %v799 = vmul.f32 %v689, 0.5
      %v800 = vmul.f32 %v754, 0.5
      %v801 = vmul.f32 %v692, 0.5
      %v802 = vmul.f32 %v757, 0.5
      %v803 = vmul.f32 %v695, 0.5
      %v804 = vmul.f32 %v760, 0.5
      %v805 = vmul.f32 %v698, 0.5
      %v806 = vmul.f32 %v763, 0.5
      %v807 = vmul.f32 %v701, 0.5
      %v808 = vmul.f32 %v766, 0.5
      %v809 = vmul.f32 %v704, 0.5
      %v810 = vmul.f32 %v769, 0.5
      %v811 = vmul.f32 %v707, 0.5
      %v812 = vmul.f32 %v772, 0.5
      %v813 = vmul.f32 %v710, 0.5
      %v814 = vmul.f32 %v775, 0.5
      %v815 = vmul.f32 %v713, 0.5
      %v816 = vmul.f32 %v778, 0.5
      %v817 = vmul.f32 %v716, 0.5
      %v818 = vmul.f32 %v781, 0.5
      %v819 = vtanh.pop %v795
      %v820 = vtanh.pop %v796
      %v821 = vtanh.pop %v797
      %v822 = vtanh.pop %v798
      %v823 = vtanh.pop %v799
      %v824 = vtanh.pop %v800
      %v825 = vtanh.pop %v801
      %v826 = vtanh.pop %v802
      %v827 = vtanh.pop %v803
      %v828 = vtanh.pop %v804
      %v829 = vtanh.pop %v805
      %v830 = vtanh.pop %v806
      %v831 = vtanh.pop %v807
      %v832 = vtanh.pop %v808
      %v833 = vtanh.pop %v809
      %v834 = vtanh.pop %v810
      %v835 = vtanh.pop %v811
      %v836 = vtanh.pop %v812
      %v837 = vtanh.pop %v813
      %v838 = vtanh.pop %v814
      %v839 = vtanh.pop %v815
      %v840 = vtanh.pop %v816
      %v841 = vtanh.pop %v817
      %v842 = vtanh.pop %v818
      %v843 = vmul.f32 %v819, 0.5
      %v844 = vmul.f32 %v820, 0.5
      %v845 = vmul.f32 %v821, 0.5
      %v846 = vmul.f32 %v822, 0.5
      %v847 = vmul.f32 %v823, 0.5
      %v848 = vmul.f32 %v824, 0.5
      %v849 = vmul.f32 %v825, 0.5
      %v850 = vmul.f32 %v826, 0.5
      %v851 = vmul.f32 %v827, 0.5
      %v852 = vmul.f32 %v828, 0.5
      %v853 = vmul.f32 %v829, 0.5
      %v854 = vmul.f32 %v830, 0.5
      %v855 = vmul.f32 %v831, 0.5
      %v856 = vmul.f32 %v832, 0.5
      %v857 = vmul.f32 %v833, 0.5
      %v858 = vmul.f32 %v834, 0.5
      %v859 = vmul.f32 %v835, 0.5
      %v860 = vmul.f32 %v836, 0.5
      %v861 = vmul.f32 %v837, 0.5
      %v862 = vmul.f32 %v838, 0.5
      %v863 = vmul.f32 %v839, 0.5
      %v864 = vmul.f32 %v840, 0.5
      %v865 = vmul.f32 %v841, 0.5
      %v866 = vmul.f32 %v842, 0.5
      %v867 = vadd.f32 %v843, 0.5
      %v868 = vadd.f32 %v844, 0.5
      %v869 = vadd.f32 %v845, 0.5
      %v870 = vadd.f32 %v846, 0.5
      %v871 = vadd.f32 %v847, 0.5
      %v872 = vadd.f32 %v848, 0.5
      %v873 = vadd.f32 %v849, 0.5
      %v874 = vadd.f32 %v850, 0.5
      %v875 = vadd.f32 %v851, 0.5
      %v876 = vadd.f32 %v852, 0.5
      %v877 = vadd.f32 %v853, 0.5
      %v878 = vadd.f32 %v854, 0.5
      %v879 = vadd.f32 %v855, 0.5
      %v880 = vadd.f32 %v856, 0.5
      %v881 = vadd.f32 %v857, 0.5
      %v882 = vadd.f32 %v858, 0.5
      %v883 = vadd.f32 %v859, 0.5
      %v884 = vadd.f32 %v860, 0.5
      %v885 = vadd.f32 %v861, 0.5
      %v886 = vadd.f32 %v862, 0.5
      %v887 = vadd.f32 %v863, 0.5
      %v888 = vadd.f32 %v864, 0.5
      %v889 = vadd.f32 %v865, 0.5
      %v890 = vadd.f32 %v866, 0.5
      %v891 = vtanh.pop %v719
      %v892 = vtanh.pop %v784
      %v893 = vtanh.pop %v722
      %v894 = vtanh.pop %v787
      %v895 = vtanh.pop %v725
      %v896 = vtanh.pop %v790
      %v897 = vtanh.pop %v728
      %v898 = vtanh.pop %v793
      %v899 = vld [vmem:[%s365] sm:$0xff]
      %v900 = vld [vmem:[%s365 + $0x8] sm:$0xff]
      %v901 = vld [vmem:[%s365 + $0x10] sm:$0xff]
      %v902 = vld [vmem:[%s365 + $0x18] sm:$0xff]
      %v903 = vld [vmem:[%s365 + $0x20] sm:$0xff]
      %v904 = vld [vmem:[%s365 + $0x28] sm:$0xff]
      %v905 = vld [vmem:[%s365 + $0x30] sm:$0xff]
      %v906 = vld [vmem:[%s365 + $0x38] sm:$0xff]
      %v907 = vmul.f32 %v875, %v899
      %v908 = vmul.f32 %v876, %v900
      %v909 = vmul.f32 %v877, %v901
      %v910 = vmul.f32 %v878, %v902
      %v911 = vmul.f32 %v879, %v903
      %v912 = vmul.f32 %v880, %v904
      %v913 = vmul.f32 %v881, %v905
      %v914 = vmul.f32 %v882, %v906
      %v915 = vmul.f32 %v867, %v891
      %v916 = vmul.f32 %v868, %v892
      %v917 = vmul.f32 %v869, %v893
      %v918 = vmul.f32 %v870, %v894
      %v919 = vmul.f32 %v871, %v895
      %v920 = vmul.f32 %v872, %v896
      %v921 = vmul.f32 %v873, %v897
      %v922 = vmul.f32 %v874, %v898
      %v923 = vadd.f32 %v907, %v915
      %v924 = vadd.f32 %v908, %v916
      %v925 = vadd.f32 %v909, %v917
      %v926 = vadd.f32 %v910, %v918
      %v927 = vadd.f32 %v911, %v919
      %v928 = vadd.f32 %v912, %v920
      %v929 = vadd.f32 %v913, %v921
      %v930 = vadd.f32 %v914, %v922
      %v931 = vtanh.pop %v923
      %v932 = vtanh.pop %v924
      %v933 = vtanh.pop %v925
      %v934 = vtanh.pop %v926
      %v935 = vtanh.pop %v927
      %v936 = vtanh.pop %v928
      %v937 = vtanh.pop %v929
      %v938 = vtanh.pop %v930
      %v939 = vmul.f32 %v883, %v931
      %v940 = vmul.f32 %v884, %v932
      %v941 = vmul.f32 %v885, %v933
      %v942 = vmul.f32 %v886, %v934
      %v943 = vmul.f32 %v887, %v935
      %v944 = vmul.f32 %v888, %v936
      %v945 = vmul.f32 %v889, %v937
      %v946 = vmul.f32 %v890, %v938
      %947 = vst [vmem:[%s385] sm:$0xff] %v923
      %948 = vst [vmem:[%s385 + $0x8] sm:$0xff] %v924
      %949 = vst [vmem:[%s385 + $0x10] sm:$0xff] %v925
      %950 = vst [vmem:[%s385 + $0x18] sm:$0xff] %v926
      %951 = vst [vmem:[%s385 + $0x20] sm:$0xff] %v927
      %952 = vst [vmem:[%s385 + $0x28] sm:$0xff] %v928
      %953 = vst [vmem:[%s385 + $0x30] sm:$0xff] %v929
      %954 = vst [vmem:[%s385 + $0x38] sm:$0xff] %v930
      %955 = vst [vmem:[%s375] sm:$0xff] %v939
      %956 = vst [vmem:[%s375 + $0x8] sm:$0xff] %v940
      %957 = vst [vmem:[%s375 + $0x10] sm:$0xff] %v941
      %958 = vst [vmem:[%s375 + $0x18] sm:$0xff] %v942
      %959 = vst [vmem:[%s375 + $0x20] sm:$0xff] %v943
      %960 = vst [vmem:[%s375 + $0x28] sm:$0xff] %v944
      %961 = vst [vmem:[%s375 + $0x30] sm:$0xff] %v945
      %962 = vst [vmem:[%s375 + $0x38] sm:$0xff] %v946
      %s963 = smul.u32 2, %s23
      %p964 = scmp.lt.s32.totalorder %s22, 1
      %s965 = scalar_select %p964, %s22, 1
      %p966 = scmp.lt.s32.totalorder %s963, 1
      %s967 = scalar_select %p966, %s963, 1
      %s968 = smul.addr %s965, 8
      %s969 = sadd.s32 %s967, %s968
      %s970 = smul.addr %s969, 8
      %s971 = scalar_lea.vmem %s5, %s970
      %s972 = smul.u32 2, %s23
      %p973 = scmp.lt.s32.totalorder %s22, 1
      %s974 = scalar_select %p973, %s22, 1
      %p975 = scmp.lt.s32.totalorder %s972, 1
      %s976 = scalar_select %p975, %s972, 1
      %s977 = smul.addr %s974, 8
      %s978 = sadd.s32 %s976, %s977
      %s979 = smul.addr %s978, 8
      %s980 = scalar_lea.vmem %s6, %s979
      // Predicated region
      $region41: #{convlstm_forward.1} parent=39 // pred_check
        %p981 = pneg %p176
      $region42: #{convlstm_forward.1} parent=39 // pred_check_branch
        %983 = sbr.rel (%p981) target = $region44
      $region43: #{convlstm_forward.1} parent=39 // pred_region
        %s984 = smul.u32 2, %s23
      $region44: #{convlstm_forward.1} parent=39 // pred_fallthru
        _
      // Predicated region
      $region45: #{convlstm_forward.1} parent=39 // pred_check
        %p985 = pneg %p204
      $region46: #{convlstm_forward.1} parent=39 // pred_check_branch
        %987 = sbr.rel (%p985) target = $region48
      $region47: #{convlstm_forward.1} parent=39 // pred_region
        %s988 = smul.u32 2, %s23
      $region48: #{convlstm_forward.1} parent=39 // pred_fallthru
        _
    $region40: #{convlstm_forward.1} parent=5 // pred_fallthru
      _
    %p989 = scmp.le.s32.totalorder 2, %s13
    // Predicated region
    $region49: #{convlstm_forward.1} parent=5 // pred_check
      %p990 = pneg %p989
    $region50: #{convlstm_forward.1} parent=5 // pred_check_branch
      %992 = sbr.rel (%p990) target = $region52
    $region51: #{convlstm_forward.1} parent=5 // pred_region
      %s993 = ssub.s32 %s13, 2
      // Predicated region
      $region53: #{convlstm_forward.1} parent=51 // pred_check
        %p994 = pneg %p182
      $region54: #{convlstm_forward.1} parent=51 // pred_check_branch
        %996 = sbr.rel (%p994) target = $region56
      $region55: #{convlstm_forward.1} parent=51 // pred_region
        %s997 = smul.u32 2, %s25
        %p998 = scmp.lt.s32.totalorder %s24, 1
        %s999 = scalar_select %p998, %s24, 1
        %p1000 = scmp.lt.s32.totalorder %s997, 1
        %s1001 = scalar_select %p1000, %s997, 1
        %s1002 = smul.addr %s999, 8
        %s1003 = sadd.s32 %s1001, %s1002
        %s1004 = smul.addr %s1003, 8
        %s1005 = scalar_lea.vmem %s5, %s1004
      $region56: #{convlstm_forward.1} parent=51 // pred_fallthru
        _
      // Predicated region
      $region57: #{convlstm_forward.1} parent=51 // pred_check
        %p1006 = pneg %p210
      $region58: #{convlstm_forward.1} parent=51 // pred_check_branch
        %1008 = sbr.rel (%p1006) target = $region60
      $region59: #{convlstm_forward.1} parent=51 // pred_region
        %s1009 = smul.u32 2, %s25
        %p1010 = scmp.lt.s32.totalorder %s24, 1
        %s1011 = scalar_select %p1010, %s24, 1
        %p1012 = scmp.lt.s32.totalorder %s1009, 1
        %s1013 = scalar_select %p1012, %s1009, 1
        %s1014 = smul.addr %s1011, 8
        %s1015 = sadd.s32 %s1013, %s1014
        %s1016 = smul.addr %s1015, 8
        %s1017 = scalar_lea.vmem %s6, %s1016
      $region60: #{convlstm_forward.1} parent=51 // pred_fallthru
        _
    $region52: #{convlstm_forward.1} parent=5 // pred_fallthru
      _
  $region6: #{convlstm_forward.1} parent=0 // loop_footer
    %s17 = sadd.s32 1, %s13
  $region7: #{convlstm_forward.1} parent=0 // loop_footer_branch
    %12 = sbr.rel target = $region3
  $region8: #{convlstm_forward.1} parent=0 // loop_exit
    _

</llo_original>
